<compile_context>
chip_gen: v7x
topology: tpu7x:2x2x1
jax: 0.10.0
libtpu: 0.0.40
codegen_flags: <defaults>
</compile_context>

<pallas_src>
import jax
import jax.numpy as jnp
from jax import lax
from jax.experimental import pallas as pl
from jax.experimental.pallas import tpu as pltpu

# ---- problem sizes (small, consistent with a Conv2d-based SNN layer) -------
T = 8                        # timesteps fused into one kernel call
N, CIN, H, W = 2, 4, 16, 16
COUT = 8
KH, KW = 3, 3
PAD = 1                      # SAME padding for 3x3 stride-1
POS_THRESH = 1.0
NEG_THRESH = -1.0

KTAPS = KH * KW * CIN        # 36   im2col contraction size
NHW = N * H * W              # 512  flattened output positions
NSPLIT = 2                   # spatial halves -> "parallel" axis (v7x megacore)
SBLK = NHW // NSPLIT         # 256  lane-dense block width
assert NHW % NSPLIT == 0 and SBLK % 128 == 0


def _spike_kernel(p_ref,                 # (1, KTAPS, SBLK) im2col patches for step t
                  w_ref,                 # (COUT, KTAPS)    conv weight
                  b_ref,                 # (COUT, 1)        conv bias
                  mem0_ref,              # (COUT, SBLK)     incoming mem state
                  spike_ref,             # (1, COUT, SBLK)  spike output for step t
                  mem_ref,               # (COUT, SBLK)     VMEM-resident mem state
                  tr_ref):               # (COUT, SBLK)     VMEM-resident transmitted
    t = pl.program_id(1)

    # Conv2d for this timestep / spatial block: one MXU matmul.
    y = jnp.dot(w_ref[...], p_ref[0],
                preferred_element_type=jnp.float32) + b_ref[...]

    # t == 0: load incoming mem, reset transmitted (as in the PyTorch forward).
    @pl.when(t == 0)
    def _():
        mem_ref[...] = mem0_ref[...]
        tr_ref[...] = jnp.zeros_like(tr_ref)

    # ---- spike dynamics (exactly as in the PyTorch forward) ----------------
    mem = mem_ref[...] + y
    pos_spike = (mem >= POS_THRESH).astype(jnp.float32) * POS_THRESH
    neg_spike = (mem <= NEG_THRESH).astype(jnp.float32) * NEG_THRESH
    neg_spike = jnp.where(tr_ref[...] > 0.0, neg_spike,
                          jnp.zeros_like(neg_spike))
    spike = pos_spike + neg_spike

    spike_ref[0] = spike
    mem_ref[...] = mem - spike
    tr_ref[...] = tr_ref[...] + spike


def spike_posneg_forward(x_seq, w_oihw, bias, mem_init):
    """Run T timesteps (starting at t=0) of SPIKE_PosNeg_layer in one call.

    x_seq:    (T, N, CIN, H, W) float32  -- NCHW input per step (PyTorch layout)
    w_oihw:   (COUT, CIN, KH, KW)        -- PyTorch Conv2d weight
    bias:     (COUT,)
    mem_init: (N, COUT, H, W)            -- membrane state (zeros after init_mem)
    Returns   (spikes (T,N,COUT,H,W), mem (N,COUT,H,W), transmitted (N,COUT,H,W))
    """
    nT = x_seq.shape[0]

    # ---- im2col in plain JAX (fused by XLA with the pad): -------------------
    # patches[t, (kh*KW + kw)*CIN + cin, n*H*W + h*W + w] = x_pad[t,n,cin,h+kh,w+kw]
    xp = jnp.pad(x_seq, ((0, 0), (0, 0), (0, 0), (PAD, PAD), (PAD, PAD)))
    taps = [xp[:, :, :, kh:kh + H, kw:kw + W]
            for kh in range(KH) for kw in range(KW)]          # each (T,N,CIN,H,W)
    p = jnp.stack(taps, axis=2)                               # (T,N,9,CIN,H,W)
    p = jnp.transpose(p, (0, 2, 3, 1, 4, 5))                  # (T,9,CIN,N,H,W)
    patches = p.reshape(nT, KTAPS, NHW)                       # (T,36,512)

    # Weight/bias/state in the kernel's channel-major, lane-dense layout.
    w2d = jnp.transpose(w_oihw, (2, 3, 1, 0)).reshape(KTAPS, COUT).T   # (COUT,36)
    b2d = bias.reshape(COUT, 1)
    mem0 = jnp.transpose(mem_init, (1, 0, 2, 3)).reshape(COUT, NHW)    # (COUT,512)

    spikes, mem_out, tr_out = pl.pallas_call(
        _spike_kernel,
        out_shape=(
            jax.ShapeDtypeStruct((nT, COUT, NHW), jnp.float32),   # spikes
            jax.ShapeDtypeStruct((COUT, NHW), jnp.float32),       # final mem
            jax.ShapeDtypeStruct((COUT, NHW), jnp.float32),       # final transmitted
        ),
        grid_spec=pltpu.PrefetchScalarGridSpec(
            num_scalar_prefetch=0,
            grid=(NSPLIT, nT),                    # (spatial-half, time)
            in_specs=[
                pl.BlockSpec((1, KTAPS, SBLK), lambda s, t: (t, 0, s)),
                pl.BlockSpec((COUT, KTAPS), lambda s, t: (0, 0)),
                pl.BlockSpec((COUT, 1), lambda s, t: (0, 0)),
                pl.BlockSpec((COUT, SBLK), lambda s, t: (0, s)),
            ],
            out_specs=[
                pl.BlockSpec((1, COUT, SBLK), lambda s, t: (t, 0, s)),
                pl.BlockSpec((COUT, SBLK), lambda s, t: (0, s)),   # mem state
                pl.BlockSpec((COUT, SBLK), lambda s, t: (0, s)),   # transmitted
            ],
        ),
        compiler_params=pltpu.CompilerParams(
            dimension_semantics=("parallel", "arbitrary")),
    )(patches, w2d, b2d, mem0)

    # Back to PyTorch NCHW layouts.
    spikes = jnp.transpose(spikes.reshape(nT, COUT, N, H, W), (0, 2, 1, 3, 4))
    mem_out = jnp.transpose(mem_out.reshape(COUT, N, H, W), (1, 0, 2, 3))
    tr_out = jnp.transpose(tr_out.reshape(COUT, N, H, W), (1, 0, 2, 3))
    return spikes, mem_out, tr_out


# ---- plain-JAX reference (mirrors the PyTorch module step by step) ----------
def _ref_forward(x_seq, w_oihw, bias, mem_init):
    mem = mem_init
    trans = jnp.zeros_like(mem_init)
    spikes = []
    for t in range(x_seq.shape[0]):
        y = lax.conv_general_dilated(
            x_seq[t], w_oihw, window_strides=(1, 1),
            padding=((PAD, PAD), (PAD, PAD)),
            dimension_numbers=("NCHW", "OIHW", "NCHW")) \
            + bias[None, :, None, None]
        if t == 0:
            trans = jnp.zeros_like(y)
        mem = mem + y
        pos = (mem >= POS_THRESH).astype(jnp.float32) * POS_THRESH
        neg = (mem <= NEG_THRESH).astype(jnp.float32) * NEG_THRESH
        neg = neg * jnp.where(trans > 0, 1.0, 0.0)
        spike = pos + neg
        mem = mem - spike
        trans = trans + spike
        spikes.append(spike)
    return jnp.stack(spikes), mem, trans


if __name__ == "__main__":
    key = jax.random.PRNGKey(0)
    kx, kw_, kb = jax.random.split(key, 3)

    # Deterministic test data made of small integers / exact binary fractions
    # so the conv result is exact in f32 and the kernel matches the reference
    # bit-for-bit (no spurious threshold flips).
    x_seq = jax.random.randint(kx, (T, N, CIN, H, W), -3, 4).astype(jnp.float32)
    w_oihw = jax.random.randint(kw_, (COUT, CIN, KH, KW), -2, 3
                                ).astype(jnp.float32) * 0.125
    bias = jax.random.randint(kb, (COUT,), -2, 3).astype(jnp.float32) * 0.25

    mem_init = jnp.zeros((N, COUT, H, W), jnp.float32)      # init_mem()

    fwd = jax.jit(spike_posneg_forward)
    spikes, mem, trans = fwd(x_seq, w_oihw, bias, mem_init)
    jax.block_until_ready((spikes, mem, trans))

    r_spikes, r_mem, r_trans = _ref_forward(x_seq, w_oihw, bias, mem_init)

    assert jnp.allclose(spikes, r_spikes, atol=1e-5), "spike mismatch"
    assert jnp.allclose(mem, r_mem, atol=1e-5), "mem mismatch"
    assert jnp.allclose(trans, r_trans, atol=1e-5), "transmitted mismatch"

    print("KERNEL_OK")
</pallas_src>

<mosaic_0001>
module attributes {stable_mosaic.version = 11 : i64} {
  func.func @_spike_kernel(%arg0: i32, %arg1: i32, %arg2: memref<1x36x256xf32, #tpu.memory_space<vmem>>, %arg3: memref<8x36xf32, #tpu.memory_space<vmem>>, %arg4: memref<8x1xf32, #tpu.memory_space<vmem>>, %arg5: memref<8x256xf32, #tpu.memory_space<vmem>>, %arg6: memref<1x8x256xf32, #tpu.memory_space<vmem>>, %arg7: memref<8x256xf32, #tpu.memory_space<vmem>>, %arg8: memref<8x256xf32, #tpu.memory_space<vmem>>) attributes {dimension_semantics = [#tpu.dimension_semantics<parallel>, #tpu.dimension_semantics<arbitrary>], iteration_bounds = array<i64: 2, 8>, scalar_prefetch = 0 : i64, scratch_operands = 0 : i64, tpu.core_type = #tpu.core_type<tc>, window_params = [{transform_indices = @transform_0, window_bounds = array<i64: 1, 36, 256>}, {pipeline_mode = #tpu.pipeline_mode<synchronous>, transform_indices = @transform_1, window_bounds = array<i64: 8, 36>}, {pipeline_mode = #tpu.pipeline_mode<synchronous>, transform_indices = @transform_2, window_bounds = array<i64: 8, 1>}, {transform_indices = @transform_3, window_bounds = array<i64: 8, 256>}, {transform_indices = @transform_4, window_bounds = array<i64: 1, 8, 256>}, {transform_indices = @transform_5, window_bounds = array<i64: 8, 256>}, {transform_indices = @transform_6, window_bounds = array<i64: 8, 256>}]} {
    %c0 = arith.constant 0 : index
    %c0_0 = arith.constant 0 : index
    %0 = vector.load %arg3[%c0, %c0_0] : memref<8x36xf32, #tpu.memory_space<vmem>>, vector<8x36xf32>
    %c0_1 = arith.constant 0 : index
    %c0_2 = arith.constant 0 : index
    %c0_3 = arith.constant 0 : index
    %1 = vector.load %arg2[%c0_1, %c0_2, %c0_3] : memref<1x36x256xf32, #tpu.memory_space<vmem>>, vector<1x36x256xf32>
    %2 = vector.shape_cast %1 : vector<1x36x256xf32> to vector<36x256xf32>
    %cst = arith.constant dense<0.000000e+00> : vector<8x256xf32>
    %3 = tpu.matmul %0, %2, %cst {dimension_numbers = #tpu.dot_dimension_numbers<[1], [0], [0], [1], [0, 0, 1, 1], [], []>} : vector<8x36xf32>, vector<36x256xf32>, vector<8x256xf32> -> vector<8x256xf32>
    %c0_4 = arith.constant 0 : index
    %c0_5 = arith.constant 0 : index
    %4 = vector.load %arg4[%c0_4, %c0_5] : memref<8x1xf32, #tpu.memory_space<vmem>>, vector<8x1xf32>
    %5 = vector.broadcast %4 : vector<8x1xf32> to vector<8x256xf32>
    %6 = arith.addf %3, %5 : vector<8x256xf32>
    %c0_i32 = arith.constant 0 : i32
    %7 = arith.cmpi eq, %arg1, %c0_i32 : i32
    %8 = arith.extui %7 : i1 to i32
    %c0_i32_6 = arith.constant 0 : i32
    %9 = arith.cmpi ne, %8, %c0_i32_6 : i32
    scf.if %9 {
      %c0_26 = arith.constant 0 : index
      %c0_27 = arith.constant 0 : index
      %38 = vector.load %arg5[%c0_26, %c0_27] : memref<8x256xf32, #tpu.memory_space<vmem>>, vector<8x256xf32>
      %c0_28 = arith.constant 0 : index
      %c0_29 = arith.constant 0 : index
      %39 = vector.load %arg7[%c0_28, %c0_29] : memref<8x256xf32, #tpu.memory_space<vmem>>, vector<8x256xf32>
      tpu.vector_store %arg7[%c0_28, %c0_29], %38 {strides = array<i32>} : memref<8x256xf32, #tpu.memory_space<vmem>>, vector<8x256xf32>,
      %cst_30 = arith.constant 0.000000e+00 : f32
      %40 = vector.broadcast %cst_30 : f32 to vector<8x256xf32>
      %c0_31 = arith.constant 0 : index
      %c0_32 = arith.constant 0 : index
      %41 = vector.load %arg8[%c0_31, %c0_32] : memref<8x256xf32, #tpu.memory_space<vmem>>, vector<8x256xf32>
      tpu.vector_store %arg8[%c0_31, %c0_32], %40 {strides = array<i32>} : memref<8x256xf32, #tpu.memory_space<vmem>>, vector<8x256xf32>,
    } else {
    }
    %c0_7 = arith.constant 0 : index
    %c0_8 = arith.constant 0 : index
    %10 = vector.load %arg7[%c0_7, %c0_8] : memref<8x256xf32, #tpu.memory_space<vmem>>, vector<8x256xf32>
    %11 = arith.addf %10, %6 : vector<8x256xf32>
    %cst_9 = arith.constant 1.000000e+00 : f32
    %12 = vector.broadcast %cst_9 : f32 to vector<8x256xf32>
    %13 = arith.cmpf oge, %11, %12 : vector<8x256xf32>
    %14 = arith.extui %13 : vector<8x256xi1> to vector<8x256xi32>
    %15 = arith.sitofp %14 : vector<8x256xi32> to vector<8x256xf32>
    %cst_10 = arith.constant 1.000000e+00 : f32
    %16 = vector.broadcast %cst_10 : f32 to vector<8x256xf32>
    %17 = arith.mulf %15, %16 : vector<8x256xf32>
    %cst_11 = arith.constant -1.000000e+00 : f32
    %18 = vector.broadcast %cst_11 : f32 to vector<8x256xf32>
    %19 = arith.cmpf ole, %11, %18 : vector<8x256xf32>
    %20 = arith.extui %19 : vector<8x256xi1> to vector<8x256xi32>
    %21 = arith.sitofp %20 : vector<8x256xi32> to vector<8x256xf32>
    %cst_12 = arith.constant -1.000000e+00 : f32
    %22 = vector.broadcast %cst_12 : f32 to vector<8x256xf32>
    %23 = arith.mulf %21, %22 : vector<8x256xf32>
    %c0_13 = arith.constant 0 : index
    %c0_14 = arith.constant 0 : index
    %24 = vector.load %arg8[%c0_13, %c0_14] : memref<8x256xf32, #tpu.memory_space<vmem>>, vector<8x256xf32>
    %cst_15 = arith.constant 0.000000e+00 : f32
    %25 = vector.broadcast %cst_15 : f32 to vector<8x256xf32>
    %26 = arith.cmpf ogt, %24, %25 : vector<8x256xf32>
    %cst_16 = arith.constant 0.000000e+00 : f32
    %27 = vector.broadcast %cst_16 : f32 to vector<8x256xf32>
    %28 = arith.select %26, %23, %27 : vector<8x256xi1>, vector<8x256xf32>
    %29 = arith.addf %17, %28 : vector<8x256xf32>
    %c0_17 = arith.constant 0 : index
    %c0_18 = arith.constant 0 : index
    %c0_19 = arith.constant 0 : index
    %30 = vector.load %arg6[%c0_17, %c0_18, %c0_19] : memref<1x8x256xf32, #tpu.memory_space<vmem>>, vector<1x8x256xf32>
    %31 = vector.shape_cast %30 : vector<1x8x256xf32> to vector<8x256xf32>
    %32 = vector.shape_cast %29 : vector<8x256xf32> to vector<1x8x256xf32>
    tpu.vector_store %arg6[%c0_17, %c0_18, %c0_19], %32 {strides = array<i32>} : memref<1x8x256xf32, #tpu.memory_space<vmem>>, vector<1x8x256xf32>,
    %33 = arith.subf %11, %29 : vector<8x256xf32>
    %c0_20 = arith.constant 0 : index
    %c0_21 = arith.constant 0 : index
    %34 = vector.load %arg7[%c0_20, %c0_21] : memref<8x256xf32, #tpu.memory_space<vmem>>, vector<8x256xf32>
    tpu.vector_store %arg7[%c0_20, %c0_21], %33 {strides = array<i32>} : memref<8x256xf32, #tpu.memory_space<vmem>>, vector<8x256xf32>,
    %c0_22 = arith.constant 0 : index
    %c0_23 = arith.constant 0 : index
    %35 = vector.load %arg8[%c0_22, %c0_23] : memref<8x256xf32, #tpu.memory_space<vmem>>, vector<8x256xf32>
    %36 = arith.addf %35, %29 : vector<8x256xf32>
    %c0_24 = arith.constant 0 : index
    %c0_25 = arith.constant 0 : index
    %37 = vector.load %arg8[%c0_24, %c0_25] : memref<8x256xf32, #tpu.memory_space<vmem>>, vector<8x256xf32>
    tpu.vector_store %arg8[%c0_24, %c0_25], %36 {strides = array<i32>} : memref<8x256xf32, #tpu.memory_space<vmem>>, vector<8x256xf32>,
    return
  }
  func.func @transform_0(%arg0: i32, %arg1: i32) -> (i32, i32, i32) {
    %c0_i32 = arith.constant 0 : i32
    %c0_i32_0 = arith.constant 0 : i32
    return %arg1, %c0_i32, %arg0 : i32, i32, i32
  }
  func.func @transform_1(%arg0: i32, %arg1: i32) -> (i32, i32) {
    %c0_i32 = arith.constant 0 : i32
    %c0_i32_0 = arith.constant 0 : i32
    %c0_i32_1 = arith.constant 0 : i32
    return %c0_i32, %c0_i32_0 : i32, i32
  }
  func.func @transform_2(%arg0: i32, %arg1: i32) -> (i32, i32) {
    %c0_i32 = arith.constant 0 : i32
    %c0_i32_0 = arith.constant 0 : i32
    %c0_i32_1 = arith.constant 0 : i32
    return %c0_i32, %c0_i32_0 : i32, i32
  }
  func.func @transform_3(%arg0: i32, %arg1: i32) -> (i32, i32) {
    %c0_i32 = arith.constant 0 : i32
    %c0_i32_0 = arith.constant 0 : i32
    return %c0_i32, %arg0 : i32, i32
  }
  func.func @transform_4(%arg0: i32, %arg1: i32) -> (i32, i32, i32) {
    %c0_i32 = arith.constant 0 : i32
    %c0_i32_0 = arith.constant 0 : i32
    return %arg1, %c0_i32, %arg0 : i32, i32, i32
  }
  func.func @transform_5(%arg0: i32, %arg1: i32) -> (i32, i32) {
    %c0_i32 = arith.constant 0 : i32
    %c0_i32_0 = arith.constant 0 : i32
    return %c0_i32, %arg0 : i32, i32
  }
  func.func @transform_6(%arg0: i32, %arg1: i32) -> (i32, i32) {
    %c0_i32 = arith.constant 0 : i32
    %c0_i32_0 = arith.constant 0 : i32
    return %c0_i32, %arg0 : i32, i32
  }
}

</mosaic_0001>

<llo_original>
// kernel: spike_posneg_forward.1
$region0: #{spike_posneg_forward.1}
  #allocation0 [shape = 'u32[]', space=smem, size = 0x4, offset = 0x4, fixed_abs, tag = 'smem constant byte address 0x4 - core index']
  #allocation1 [shape = 'u32[144,128]{1,0:T(1,128)}', space=vmem, size = 0x12000, scoped, tag = 'internal scratch']
  %s0 = inlined_call_operand.vmem [shape: f32[8,36,512], index: 0, kind: input, shape index: {}]
  %s1 = inlined_call_operand.vmem [shape: f32[8,36], index: 1, kind: input, shape index: {}]
  %s2 = inlined_call_operand.vmem [shape: f32[8,1], index: 2, kind: input, shape index: {}]
  %s3 = inlined_call_operand.vmem [shape: f32[8,512], index: 3, kind: input, shape index: {}]
  %s4 = inlined_call_operand.vmem [shape: f32[8,8,512], index: 4, kind: output, shape index: {0}]
  %s5 = inlined_call_operand.vmem [shape: f32[8,512], index: 5, kind: output, shape index: {1}]
  %s6 = inlined_call_operand.vmem [shape: f32[8,512], index: 6, kind: output, shape index: {2}]
  %7 = xla_tuple %s4, %s5, %s6
  %s8 = sld [smem:[#allocation0]]
  $region92: #{spike_posneg_forward.1} parent=0
    _
  %s10 = ssub.s32 1, %s8
  %s11 = scalar_select 0, %s10, %s8
  $region1: #{spike_posneg_forward.1} parent=0
    #allocation2 [shape = 'u8[81920]{0}', space=vmem, size = 0x14000, scoped, tag = 'input window, operand 0']
    loop: start=0, step=1, limit=18
    $region2: #{spike_posneg_forward.1} parent=1 // loop_pre_header
      _
    $region3: #{spike_posneg_forward.1} parent=1 // loop_header
      %s13 = sphi 0, %s17
      %p14 = scmp.ge.s32.totalorder %s13, 18
      %s20 = sphi 0, %s32
      %s21 = sphi 0, %s28
      %s22 = sphi 0, %s20
      %s23 = sphi 0, %s21
      %s24 = sphi 0, %s22
      %s25 = sphi 0, %s23
      %s37 = sphi 0, %s39
      %s40 = sphi 0, %s37
      %s41 = sphi 0, %s40
      %s57 = sphi 0, %s41
      %s61 = sphi 0, %s61
      %s63 = sphi 0, %s61
      %s64 = sphi 0, %s63
      %s78 = sphi 0, %s64
      %s82 = sphi 0, %s82
      %s84 = sphi 0, %s82
      %s85 = sphi 0, %s84
      %s99 = sphi 0, %s85
      %s105 = sphi 0, %s107
      %s108 = sphi 0, %s105
      %s109 = sphi 0, %s108
      %s125 = sphi 0, %s109
      %s133 = sphi 0, %s135
      %s136 = sphi 0, %s133
      %s137 = sphi 0, %s136
      %s153 = sphi 0, %s137
      %s159 = sphi 0, %s161
      %s162 = sphi 0, %s159
      %s163 = sphi 0, %s162
      %s179 = sphi 0, %s163
      %s185 = sphi 0, %s187
      %s188 = sphi 0, %s185
      %s189 = sphi 0, %s188
      %s205 = sphi 0, %s189
    $region4: #{spike_posneg_forward.1} parent=1 // loop_header_branch
      %16 = sbr.rel (%p14) target = $region8
    $region5: #{spike_posneg_forward.1} parent=1 // loop_body
      %s18 = ssub.s32 %s13, 1
      %s19 = ssub.s32 %s13, 2
      %s26 = sadd.s32 1, %s21
      %p27 = scmp.ge.s32.totalorder %s26, 8
      %s28 = scalar_select %p27, 0, %s26
      %s29 = sadd.s32 1, %s20
      %s30 = scalar_select %p27, %s29, %s20
      %p31 = scmp.ge.s32.totalorder %s30, 2
      %s32 = scalar_select %p31, 0, %s30
      %s33 = ssub.s32 %s21, %s28
      %s34 = ssub.s32 %s20, %s32
      %s35 = sor.u32 %s33, %s34
      %p36 = scmp.eq.s32.totalorder %s35, 0
      %s38 = sadd.s32 %s37, 1
      %s39 = scalar_select %p36, %s37, %s38
      %p42 = pneg %p36
      %p43 = scmp.eq.s32.totalorder %s13, 15
      %p44 = por %p42, %p43
      %p45 = scmp.ne.s32.totalorder %s37, %s40
      %p46 = scmp.eq.s32.totalorder %s13, 0
      %p47 = por %p45, %p46
      %p48 = scmp.ne.s32.totalorder %s37, %s40
      %p49 = scmp.eq.s32.totalorder %s18, 15
      %p50 = por %p48, %p49
      %p51 = scmp.ne.s32.totalorder %s40, %s41
      %p52 = scmp.eq.s32.totalorder %s18, 0
      %p53 = por %p51, %p52
      %p54 = scmp.ne.s32.totalorder %s40, %s41
      %p55 = scmp.eq.s32.totalorder %s19, 15
      %p56 = por %p54, %p55
      %p58 = scmp.ne.s32.totalorder %s41, %s57
      %p59 = scmp.eq.s32.totalorder %s19, 0
      %p60 = por %p58, %p59
      %s62 = sadd.s32 %s61, 1
      %p65 = scmp.eq.s32.totalorder %s13, 15
      %p66 = scmp.ne.s32.totalorder %s61, %s63
      %p67 = scmp.eq.s32.totalorder %s13, 0
      %p68 = por %p66, %p67
      %p69 = scmp.ne.s32.totalorder %s61, %s63
      %p70 = scmp.eq.s32.totalorder %s18, 15
      %p71 = por %p69, %p70
      %p72 = scmp.ne.s32.totalorder %s63, %s64
      %p73 = scmp.eq.s32.totalorder %s18, 0
      %p74 = por %p72, %p73
      %p75 = scmp.ne.s32.totalorder %s63, %s64
      %p76 = scmp.eq.s32.totalorder %s19, 15
      %p77 = por %p75, %p76
      %p79 = scmp.ne.s32.totalorder %s64, %s78
      %p80 = scmp.eq.s32.totalorder %s19, 0
      %p81 = por %p79, %p80
      %s83 = sadd.s32 %s82, 1
      %p86 = scmp.eq.s32.totalorder %s13, 15
      %p87 = scmp.ne.s32.totalorder %s82, %s84
      %p88 = scmp.eq.s32.totalorder %s13, 0
      %p89 = por %p87, %p88
      %p90 = scmp.ne.s32.totalorder %s82, %s84
      %p91 = scmp.eq.s32.totalorder %s18, 15
      %p92 = por %p90, %p91
      %p93 = scmp.ne.s32.totalorder %s84, %s85
      %p94 = scmp.eq.s32.totalorder %s18, 0
      %p95 = por %p93, %p94
      %p96 = scmp.ne.s32.totalorder %s84, %s85
      %p97 = scmp.eq.s32.totalorder %s19, 15
      %p98 = por %p96, %p97
      %p100 = scmp.ne.s32.totalorder %s85, %s99
      %p101 = scmp.eq.s32.totalorder %s19, 0
      %p102 = por %p100, %p101
      %s103 = ssub.s32 %s20, %s32
      %p104 = scmp.eq.s32.totalorder %s103, 0
      %s106 = sadd.s32 %s105, 1
      %s107 = scalar_select %p104, %s105, %s106
      %p110 = pneg %p104
      %p111 = scmp.eq.s32.totalorder %s13, 15
      %p112 = por %p110, %p111
      %p113 = scmp.ne.s32.totalorder %s105, %s108
      %p114 = scmp.eq.s32.totalorder %s13, 0
      %p115 = por %p113, %p114
      %p116 = scmp.ne.s32.totalorder %s105, %s108
      %p117 = scmp.eq.s32.totalorder %s18, 15
      %p118 = por %p116, %p117
      %p119 = scmp.ne.s32.totalorder %s108, %s109
      %p120 = scmp.eq.s32.totalorder %s18, 0
      %p121 = por %p119, %p120
      %p122 = scmp.ne.s32.totalorder %s108, %s109
      %p123 = scmp.eq.s32.totalorder %s19, 15
      %p124 = por %p122, %p123
      %p126 = scmp.ne.s32.totalorder %s109, %s125
      %p127 = scmp.eq.s32.totalorder %s19, 0
      %p128 = por %p126, %p127
      %s129 = ssub.s32 %s21, %s28
      %s130 = ssub.s32 %s20, %s32
      %s131 = sor.u32 %s129, %s130
      %p132 = scmp.eq.s32.totalorder %s131, 0
      %s134 = sadd.s32 %s133, 1
      %s135 = scalar_select %p132, %s133, %s134
      %p138 = pneg %p132
      %p139 = scmp.eq.s32.totalorder %s13, 15
      %p140 = por %p138, %p139
      %p141 = scmp.ne.s32.totalorder %s133, %s136
      %p142 = scmp.eq.s32.totalorder %s13, 0
      %p143 = por %p141, %p142
      %p144 = scmp.ne.s32.totalorder %s133, %s136
      %p145 = scmp.eq.s32.totalorder %s18, 15
      %p146 = por %p144, %p145
      %p147 = scmp.ne.s32.totalorder %s136, %s137
      %p148 = scmp.eq.s32.totalorder %s18, 0
      %p149 = por %p147, %p148
      %p150 = scmp.ne.s32.totalorder %s136, %s137
      %p151 = scmp.eq.s32.totalorder %s19, 15
      %p152 = por %p150, %p151
      %p154 = scmp.ne.s32.totalorder %s137, %s153
      %p155 = scmp.eq.s32.totalorder %s19, 0
      %p156 = por %p154, %p155
      %s157 = ssub.s32 %s20, %s32
      %p158 = scmp.eq.s32.totalorder %s157, 0
      %s160 = sadd.s32 %s159, 1
      %s161 = scalar_select %p158, %s159, %s160
      %p164 = pneg %p158
      %p165 = scmp.eq.s32.totalorder %s13, 15
      %p166 = por %p164, %p165
      %p167 = scmp.ne.s32.totalorder %s159, %s162
      %p168 = scmp.eq.s32.totalorder %s13, 0
      %p169 = por %p167, %p168
      %p170 = scmp.ne.s32.totalorder %s159, %s162
      %p171 = scmp.eq.s32.totalorder %s18, 15
      %p172 = por %p170, %p171
      %p173 = scmp.ne.s32.totalorder %s162, %s163
      %p174 = scmp.eq.s32.totalorder %s18, 0
      %p175 = por %p173, %p174
      %p176 = scmp.ne.s32.totalorder %s162, %s163
      %p177 = scmp.eq.s32.totalorder %s19, 15
      %p178 = por %p176, %p177
      %p180 = scmp.ne.s32.totalorder %s163, %s179
      %p181 = scmp.eq.s32.totalorder %s19, 0
      %p182 = por %p180, %p181
      %s183 = ssub.s32 %s20, %s32
      %p184 = scmp.eq.s32.totalorder %s183, 0
      %s186 = sadd.s32 %s185, 1
      %s187 = scalar_select %p184, %s185, %s186
      %p190 = pneg %p184
      %p191 = scmp.eq.s32.totalorder %s13, 15
      %p192 = por %p190, %p191
      %p193 = scmp.ne.s32.totalorder %s185, %s188
      %p194 = scmp.eq.s32.totalorder %s13, 0
      %p195 = por %p193, %p194
      %p196 = scmp.ne.s32.totalorder %s185, %s188
      %p197 = scmp.eq.s32.totalorder %s18, 15
      %p198 = por %p196, %p197
      %p199 = scmp.ne.s32.totalorder %s188, %s189
      %p200 = scmp.eq.s32.totalorder %s18, 0
      %p201 = por %p199, %p200
      %p202 = scmp.ne.s32.totalorder %s188, %s189
      %p203 = scmp.eq.s32.totalorder %s19, 15
      %p204 = por %p202, %p203
      %p206 = scmp.ne.s32.totalorder %s189, %s205
      %p207 = scmp.eq.s32.totalorder %s19, 0
      %p208 = por %p206, %p207
      %p209 = scmp.le.s32.totalorder 1, %s13
      %p210 = scmp.lt.s32.totalorder %s13, 17
      %p211 = pnand %p209, %p210
      %p212 = pneg %p211
      // Predicated region
      $region9: #{spike_posneg_forward.1} parent=5 // pred_check
        _
      $region10: #{spike_posneg_forward.1} parent=5 // pred_check_branch
        %214 = sbr.rel (%p211) target = $region12
      $region11: #{spike_posneg_forward.1} parent=5 // pred_region
        %s215 = ssub.s32 %s13, 1
        // Predicated region
        $region13: #{spike_posneg_forward.1} parent=11 // pred_check
          %p216 = pneg %p74
        $region14: #{spike_posneg_forward.1} parent=11 // pred_check_branch
          %218 = sbr.rel (%p216) target = $region16
        $region15: #{spike_posneg_forward.1} parent=11 // pred_region
          _
        $region16: #{spike_posneg_forward.1} parent=11 // pred_fallthru
          _
        // Predicated region
        $region17: #{spike_posneg_forward.1} parent=11 // pred_check
          %p219 = pneg %p95
        $region18: #{spike_posneg_forward.1} parent=11 // pred_check_branch
          %221 = sbr.rel (%p219) target = $region20
        $region19: #{spike_posneg_forward.1} parent=11 // pred_region
          _
        $region20: #{spike_posneg_forward.1} parent=11 // pred_fallthru
          _
      $region12: #{spike_posneg_forward.1} parent=5 // pred_fallthru
        _
      %p222 = scmp.lt.s32.totalorder %s13, 16
      // Predicated region
      $region21: #{spike_posneg_forward.1} parent=5 // pred_check
        %p223 = pneg %p222
      $region22: #{spike_posneg_forward.1} parent=5 // pred_check_branch
        %225 = sbr.rel (%p223) target = $region24
      $region23: #{spike_posneg_forward.1} parent=5 // pred_region
        // Predicated region
        $region25: #{spike_posneg_forward.1} parent=23 // pred_check
          %p226 = pneg %p47
        $region26: #{spike_posneg_forward.1} parent=23 // pred_check_branch
          %228 = sbr.rel (%p226) target = $region28
        $region27: #{spike_posneg_forward.1} parent=23 // pred_region
          %s229 = sand.u32 %s37, 1
          %s230 = sand.u32 %s37, 1
          %s231 = smul.addr %s230, 80
          %s232 = scalar_lea.vmem [#allocation2], %s231
          %s233 = smul.u32 2, %s20
          %s234 = smul.addr %s21, 20
          %s235 = sadd.s32 %s233, %s234
          %s236 = smul.addr %s235, 8
          %s237 = scalar_lea.vmem %s0, %s236
          // Predicated region
          $region29: #{spike_posneg_forward.1} parent=27 // pred_check
            _
          $region30: #{spike_posneg_forward.1} parent=27 // pred_check_branch
            %239 = sbr.rel (0) target = $region32
          $region31: #{spike_posneg_forward.1} parent=27 // pred_region
            // Predicated region
            $region33: #{spike_posneg_forward.1} parent=31 // pred_check
              _
            $region34: #{spike_posneg_forward.1} parent=31 // pred_check_branch
              %241 = sbr.rel (0) target = $region36
            $region35: #{spike_posneg_forward.1} parent=31 // pred_region
              loop: start=0, step=1, limit=1
              $region37: #{spike_posneg_forward.1} parent=35 // loop_pre_header
                _
              $region38: #{spike_posneg_forward.1} parent=35 // loop_header
                %s243 = sphi 0, %s247
                %p244 = scmp.ge.s32.totalorder %s243, 1
                %s248 = sphi %s237, %s237
                %s249 = sphi %s232, %s232
              $region39: #{spike_posneg_forward.1} parent=35 // loop_header_branch
                %246 = sbr.rel (%p244) target = $region43
              $region40: #{spike_posneg_forward.1} parent=35 // loop_body
                %v250 = vld [vmem:[%s248] sm:$0xff]
                %251 = vst [vmem:[%s249] sm:$0xff] %v250
                %v252 = vld [vmem:[%s248 + $0x8] sm:$0xff]
                %253 = vst [vmem:[%s249 + $0x8] sm:$0xff] %v252
                %v254 = vld [vmem:[%s248 + $0x20] sm:$0xff]
                %255 = vst [vmem:[%s249 + $0x10] sm:$0xff] %v254
                %v256 = vld [vmem:[%s248 + $0x28] sm:$0xff]
                %257 = vst [vmem:[%s249 + $0x18] sm:$0xff] %v256
                %v258 = vld [vmem:[%s248 + $0x40] sm:$0xff]
                %259 = vst [vmem:[%s249 + $0x20] sm:$0xff] %v258
                %v260 = vld [vmem:[%s248 + $0x48] sm:$0xff]
                %261 = vst [vmem:[%s249 + $0x28] sm:$0xff] %v260
                %v262 = vld [vmem:[%s248 + $0x60] sm:$0xff]
                %263 = vst [vmem:[%s249 + $0x30] sm:$0xff] %v262
                %v264 = vld [vmem:[%s248 + $0x68] sm:$0xff]
                %265 = vst [vmem:[%s249 + $0x38] sm:$0xff] %v264
                %v266 = vld [vmem:[%s248 + $0x80] sm:$0xff]
                %267 = vst [vmem:[%s249 + $0x40] sm:$0xff] %v266
                %v268 = vld [vmem:[%s248 + $0x88] sm:$0xff]
                %269 = vst [vmem:[%s249 + $0x48] sm:$0xff] %v268
              $region41: #{spike_posneg_forward.1} parent=35 // loop_footer
                %s247 = sadd.s32 1, %s243
              $region42: #{spike_posneg_forward.1} parent=35 // loop_footer_branch
                %242 = sbr.rel target = $region38
              $region43: #{spike_posneg_forward.1} parent=35 // loop_exit
                _
            $region36: #{spike_posneg_forward.1} parent=31 // pred_fallthru
              _
            // Predicated region
            $region44: #{spike_posneg_forward.1} parent=31 // pred_check
              _
            $region45: #{spike_posneg_forward.1} parent=31 // pred_check_branch
              %271 = sbr.rel target = $region47
            $region46: #{spike_posneg_forward.1} parent=31 // pred_region
              _
            $region47: #{spike_posneg_forward.1} parent=31 // pred_fallthru
              _
          $region32: #{spike_posneg_forward.1} parent=27 // pred_fallthru
            _
          %272 = vnop
        $region28: #{spike_posneg_forward.1} parent=23 // pred_fallthru
          _
        // Predicated region
        $region48: #{spike_posneg_forward.1} parent=23 // pred_check
          %p273 = pneg %p115
        $region49: #{spike_posneg_forward.1} parent=23 // pred_check_branch
          %275 = sbr.rel (%p273) target = $region51
        $region50: #{spike_posneg_forward.1} parent=23 // pred_region
          %s276 = smul.u32 2, %s20
          %p277 = scmp.lt.s32.totalorder %s276, 3
          %s278 = scalar_select %p277, %s276, 3
          %s279 = smul.addr %s278, 8
          %s280 = scalar_lea.vmem %s3, %s279
          %s281 = smul.u32 2, %s20
        $region51: #{spike_posneg_forward.1} parent=23 // pred_fallthru
          _
      $region24: #{spike_posneg_forward.1} parent=5 // pred_fallthru
        _
      %p282 = scmp.le.s32.totalorder 1, %s13
      %p283 = scmp.lt.s32.totalorder %s13, 17
      %p284 = pnand %p282, %p283
      %p285 = pneg %p284
      // Predicated region
      $region52: #{spike_posneg_forward.1} parent=5 // pred_check
        _
      $region53: #{spike_posneg_forward.1} parent=5 // pred_check_branch
        %287 = sbr.rel (%p284) target = $region55
      $region54: #{spike_posneg_forward.1} parent=5 // pred_region
        %s288 = ssub.s32 %s13, 1
        %s289 = sand.u32 %s40, 1
        %s290 = sand.u32 %s40, 1
        %s291 = smul.addr %s290, 80
        %s292 = scalar_lea.vmem [#allocation2], %s291
        // Predicated region
        $region56: #{spike_posneg_forward.1} parent=54 // pred_check
          %p293 = pneg %p53
        $region57: #{spike_posneg_forward.1} parent=54 // pred_check_branch
          %295 = sbr.rel (%p293) target = $region59
        $region58: #{spike_posneg_forward.1} parent=54 // pred_region
          _
        $region59: #{spike_posneg_forward.1} parent=54 // pred_fallthru
          _
        %s296 = sand.u32 %s40, 1
        %s297 = sand.u32 %s40, 1
        %s298 = smul.addr %s297, 80
        %s299 = scalar_lea.vmem [#allocation2], %s298
        %p300 = pneg %p53
        %p301 = pneg %p50
        %p302 = pneg %p74
        %p303 = pneg %p71
        %p304 = pneg %p95
        %p305 = pneg %p92
        %s306 = smul.u32 2, %s22
        %p307 = scmp.lt.s32.totalorder %s306, 3
        %s308 = scalar_select %p307, %s306, 3
        %s309 = smul.addr %s308, 8
        %s310 = scalar_lea.vmem %s3, %s309
        %p311 = pneg %p121
        %p312 = pneg %p118
        %p313 = pneg %p149
        %p314 = pneg %p146
        %s315 = smul.u32 2, %s22
        %p316 = scmp.lt.s32.totalorder %s23, 7
        %s317 = scalar_select %p316, %s23, 7
        %p318 = scmp.lt.s32.totalorder %s315, 3
        %s319 = scalar_select %p318, %s315, 3
        %s320 = smul.addr %s317, 4
        %s321 = sadd.s32 %s319, %s320
        %s322 = smul.addr %s321, 8
        %s323 = scalar_lea.vmem %s4, %s322
        %p324 = pneg %p175
        %p325 = pneg %p172
        %s326 = smul.u32 2, %s22
        %p327 = scmp.lt.s32.totalorder %s326, 3
        %s328 = scalar_select %p327, %s326, 3
        %s329 = smul.addr %s328, 8
        %s330 = scalar_lea.vmem %s5, %s329
        %p331 = pneg %p201
        %p332 = pneg %p198
        %s333 = smul.u32 2, %s22
        %p334 = scmp.lt.s32.totalorder %s333, 3
        %s335 = scalar_select %p334, %s333, 3
        %s336 = smul.addr %s335, 8
        %s337 = scalar_lea.vmem %s6, %s336
        %s338 = smul.u32 2, %s22
        %s339 = smul.u32 2, %s22
        %p340 = scmp.lt.s32.totalorder %s339, 3
        %s341 = scalar_select %p340, %s339, 3
        %s342 = smul.addr %s341, 8
        %s343 = scalar_lea.vmem %s3, %s342
        %s344 = smul.u32 2, %s22
        %s345 = smul.u32 2, %s22
        %p346 = scmp.lt.s32.totalorder %s23, 7
        %s347 = scalar_select %p346, %s23, 7
        %p348 = scmp.lt.s32.totalorder %s345, 3
        %s349 = scalar_select %p348, %s345, 3
        %s350 = smul.addr %s347, 4
        %s351 = sadd.s32 %s349, %s350
        %s352 = smul.addr %s351, 8
        %s353 = scalar_lea.vmem %s4, %s352
        %s354 = smul.u32 2, %s22
        %s355 = smul.u32 2, %s22
        %p356 = scmp.lt.s32.totalorder %s355, 3
        %s357 = scalar_select %p356, %s355, 3
        %s358 = smul.addr %s357, 8
        %s359 = scalar_lea.vmem %s5, %s358
        %s360 = smul.u32 2, %s22
        %s361 = smul.u32 2, %s22
        %p362 = scmp.lt.s32.totalorder %s361, 3
        %s363 = scalar_select %p362, %s361, 3
        %s364 = smul.addr %s363, 8
        %s365 = scalar_lea.vmem %s6, %s364
        %s366 = smul.u32 2, %s22
        %v367 = vld [vmem:[%s1] sm:$0xff]
        %v368 = vld [vmem:[%s292] sm:$0xff]
        %v369 = vld [vmem:[%s292 + $0x8] sm:$0xff]
        %v370 = vld [vmem:[%s292 + $0x10] sm:$0xff]
        %v371 = vld [vmem:[%s292 + $0x18] sm:$0xff]
        %v372 = vld [vmem:[%s292 + $0x20] sm:$0xff]
        %v373 = vld [vmem:[%s292 + $0x28] sm:$0xff]
        %v374 = vld [vmem:[%s292 + $0x30] sm:$0xff]
        %v375 = vld [vmem:[%s292 + $0x38] sm:$0xff]
        %v376 = vld [vmem:[%s292 + $0x40] sm:$0xf]
        %v377 = vld [vmem:[%s292 + $0x48] sm:$0xf]
        %v378 = vld [vmem:[%s2] sm:$0xff]
        %380 = vset.pattern.permute.xlu0 0
        %381 = vperm.xlu0 %380, %v378
        %v382 = vpop.permute.xlu0 %381
        %vm384 = vcmask 293888
        %v386 = vsel %vm384, %v367, 0
        %vm388 = vcmask 1043456
        %v390 = vsel %vm388, %v376, 0
        %v393 = vsel %vm388, %v377, 0
        %395 = vmatprep.subr.mxu0 %v369
        %396 = vmatpush1.msra.mxu0 %v368
        %397 = vmatprep.subr.mxu0 %v371
        %398 = vmatpush1.msra.mxu0 %v370
        %399 = vmatprep.subr.mxu0 %v373
        %400 = vmatpush1.msra.mxu0 %v372
        %401 = vmatprep.subr.mxu0 %v375
        %402 = vmatpush1.msra.mxu0 %v374
        %403 = vmatprep.subr.mxu0 %v393
        %404 = vmatpush1.msra.mxu0 %v390
        %405 = vmatprep.subr.mxu0 0.0
        %406 = vmatpush1.msra.mxu0 0.0
        %407 = vmatprep.subr.mxu0 0.0
        %408 = vmatpush1.msra.mxu0 0.0
        %409 = vmatprep.subr.mxu0 0.0
        %410 = vmatpush1.msra.mxu0 0.0
        %411 = vmatprep.subr.mxu0 0.0
        %412 = vmatpush1.msra.mxu0 0.0
        %413 = vmatprep.subr.mxu0 0.0
        %414 = vmatpush1.msra.mxu0 0.0
        %415 = vmatprep.subr.mxu0 0.0
        %416 = vmatpush1.msra.mxu0 0.0
        %417 = vmatprep.subr.mxu0 0.0
        %418 = vmatpush1.msra.mxu0 0.0
        %419 = vmatprep.subr.mxu0 0.0
        %420 = vmatpush1.msra.mxu0 0.0
        %421 = vmatprep.subr.mxu0 0.0
        %422 = vmatpush1.msra.mxu0 0.0
        %423 = vmatprep.subr.mxu0 0.0
        %424 = vmatpush1.msra.mxu0 0.0
        %425 = vmatprep.subr.mxu0 0.0
        %426 = vmatpush1.msra.mxu0 0.0
        %427 = vmatprep.subr.mxu0 0.0
        %428 = vmatpush1.msra.mxu0 0.0
        %429 = vmatprep.subr.mxu0 0.0
        %430 = vmatpush1.msra.mxu0 0.0
        %431 = vmatprep.subr.mxu0 0.0
        %432 = vmatpush1.msra.mxu0 0.0
        %433 = vmatprep.subr.mxu0 0.0
        %434 = vmatpush1.msra.mxu0 0.0
        %435 = vmatprep.subr.mxu0 0.0
        %436 = vmatpush1.msra.mxu0 0.0
        %437 = vmatprep.subr.mxu0 0.0
        %438 = vmatpush1.msra.mxu0 0.0
        %439 = vmatprep.subr.mxu0 0.0
        %440 = vmatpush1.msra.mxu0 0.0
        %441 = vmatprep.subr.mxu0 0.0
        %442 = vmatpush1.msra.mxu0 0.0
        %443 = vmatprep.subr.mxu0 0.0
        %444 = vmatpush1.msra.mxu0 0.0
        %445 = vmatprep.subr.mxu0 0.0
        %446 = vmatpush1.msra.mxu0 0.0
        %447 = vmatprep.subr.mxu0 0.0
        %448 = vmatpush1.msra.mxu0 0.0
        %449 = vmatprep.subr.mxu0 0.0
        %450 = vmatpush1.msra.mxu0 0.0
        %451 = vmatprep.subr.mxu0 0.0
        %452 = vmatpush1.msra.mxu0 0.0
        %453 = vmatprep.subr.mxu0 0.0
        %454 = vmatpush1.msra.mxu0 0.0
        %455 = vmatprep.subr.mxu0 0.0
        %456 = vmatpush1.msra.mxu0 0.0
        %457 = vmatprep.subr.mxu0 0.0
        %458 = vmatpush1.msra.mxu0 0.0
        %459 = vmatprep.mubr.f32.mxu0 0.0
        %460 = vmatmul.mubr.f32.gmra.mrb[0].mxu0 %v386
        %v461 = vpop.f32.mrb[0].mxu0
        %v462 = vadd.f32 %v382, %v461
        %v463 = vpop.f32.mrb[0].mxu0
        %v464 = vadd.f32 %v382, %v463
        %465 = vdwg.mxu0
        %p466 = scmp.eq.s32.totalorder %s23, 0
        // Predicated region
        $region60: #{spike_posneg_forward.1} parent=54 // pred_check
          %p467 = pneg %p466
        $region61: #{spike_posneg_forward.1} parent=54 // pred_check_branch
          %469 = sbr.rel (%p467) target = $region63
        $region62: #{spike_posneg_forward.1} parent=54 // pred_region
          %v470 = vld [vmem:[%s343] sm:$0xff]
          %v471 = vld [vmem:[%s343 + $0x8] sm:$0xff]
          %472 = vst [vmem:[%s359] sm:$0xff] %v470
          %473 = vst [vmem:[%s359 + $0x8] sm:$0xff] %v471
          %474 = vst [vmem:[%s365] sm:$0xff] 0.0
          %475 = vst [vmem:[%s365 + $0x8] sm:$0xff] 0.0
        $region63: #{spike_posneg_forward.1} parent=54 // pred_fallthru
          _
        %v476 = vld [vmem:[%s359] sm:$0xff]
        %v477 = vld [vmem:[%s359 + $0x8] sm:$0xff]
        %v478 = vadd.f32 %v476, %v462
        %v479 = vadd.f32 %v477, %v464
        %vm480 = vcmp.ge.f32.partialorder %v478, 1.0
        %vm481 = vcmp.ge.f32.partialorder %v479, 1.0
        %v482 = vsel %vm480, 1, 0
        %v483 = vsel %vm481, 1, 0
        %v484 = vcvt.s32.f32 %v482
        %v485 = vcvt.s32.f32 %v483
        %vm486 = vcmp.le.f32.partialorder %v478, -1.0
        %vm487 = vcmp.le.f32.partialorder %v479, -1.0
        %v488 = vsel %vm486, 1, 0
        %v489 = vsel %vm487, 1, 0
        %v490 = vcvt.s32.f32 %v488
        %v491 = vcvt.s32.f32 %v489
        %v492 = vmul.f32 %v490, -1.0
        %v493 = vmul.f32 %v491, -1.0
        %v494 = vld [vmem:[%s365] sm:$0xff]
        %v495 = vld [vmem:[%s365 + $0x8] sm:$0xff]
        %vm496 = vcmp.gt.f32.partialorder %v494, 0.0
        %vm497 = vcmp.gt.f32.partialorder %v495, 0.0
        %v498 = vsel %vm496, %v492, 0.0
        %v499 = vsel %vm497, %v493, 0.0
        %v500 = vadd.f32 %v484, %v498
        %v501 = vadd.f32 %v485, %v499
        %502 = vst [vmem:[%s353] sm:$0xff] %v500
        %503 = vst [vmem:[%s353 + $0x8] sm:$0xff] %v501
        %v504 = vsub.f32 %v478, %v500
        %v505 = vsub.f32 %v479, %v501
        %506 = vst [vmem:[%s359] sm:$0xff] %v504
        %507 = vst [vmem:[%s359 + $0x8] sm:$0xff] %v505
        %v508 = vld [vmem:[%s365] sm:$0xff]
        %v509 = vld [vmem:[%s365 + $0x8] sm:$0xff]
        %v510 = vadd.f32 %v508, %v500
        %v511 = vadd.f32 %v509, %v501
        %512 = vst [vmem:[%s365] sm:$0xff] %v510
        %513 = vst [vmem:[%s365 + $0x8] sm:$0xff] %v511
        %s514 = smul.u32 2, %s22
        %p515 = scmp.lt.s32.totalorder %s23, 7
        %s516 = scalar_select %p515, %s23, 7
        %p517 = scmp.lt.s32.totalorder %s514, 3
        %s518 = scalar_select %p517, %s514, 3
        %s519 = smul.addr %s516, 4
        %s520 = sadd.s32 %s518, %s519
        %s521 = smul.addr %s520, 8
        %s522 = scalar_lea.vmem %s4, %s521
        %s523 = smul.u32 2, %s22
        %p524 = scmp.lt.s32.totalorder %s523, 3
        %s525 = scalar_select %p524, %s523, 3
        %s526 = smul.addr %s525, 8
        %s527 = scalar_lea.vmem %s5, %s526
        %s528 = smul.u32 2, %s22
        %p529 = scmp.lt.s32.totalorder %s528, 3
        %s530 = scalar_select %p529, %s528, 3
        %s531 = smul.addr %s530, 8
        %s532 = scalar_lea.vmem %s6, %s531
        // Predicated region
        $region64: #{spike_posneg_forward.1} parent=54 // pred_check
          %p533 = pneg %p146
        $region65: #{spike_posneg_forward.1} parent=54 // pred_check_branch
          %535 = sbr.rel (%p533) target = $region67
        $region66: #{spike_posneg_forward.1} parent=54 // pred_region
          %s536 = smul.u32 2, %s22
        $region67: #{spike_posneg_forward.1} parent=54 // pred_fallthru
          _
        // Predicated region
        $region68: #{spike_posneg_forward.1} parent=54 // pred_check
          %p537 = pneg %p172
        $region69: #{spike_posneg_forward.1} parent=54 // pred_check_branch
          %539 = sbr.rel (%p537) target = $region71
        $region70: #{spike_posneg_forward.1} parent=54 // pred_region
          %s540 = smul.u32 2, %s22
        $region71: #{spike_posneg_forward.1} parent=54 // pred_fallthru
          _
        // Predicated region
        $region72: #{spike_posneg_forward.1} parent=54 // pred_check
          %p541 = pneg %p198
        $region73: #{spike_posneg_forward.1} parent=54 // pred_check_branch
          %543 = sbr.rel (%p541) target = $region75
        $region74: #{spike_posneg_forward.1} parent=54 // pred_region
          %s544 = smul.u32 2, %s22
        $region75: #{spike_posneg_forward.1} parent=54 // pred_fallthru
          _
      $region55: #{spike_posneg_forward.1} parent=5 // pred_fallthru
        _
      %p545 = scmp.le.s32.totalorder 2, %s13
      // Predicated region
      $region76: #{spike_posneg_forward.1} parent=5 // pred_check
        %p546 = pneg %p545
      $region77: #{spike_posneg_forward.1} parent=5 // pred_check_branch
        %548 = sbr.rel (%p546) target = $region79
      $region78: #{spike_posneg_forward.1} parent=5 // pred_region
        %s549 = ssub.s32 %s13, 2
        // Predicated region
        $region80: #{spike_posneg_forward.1} parent=78 // pred_check
          %p550 = pneg %p152
        $region81: #{spike_posneg_forward.1} parent=78 // pred_check_branch
          %552 = sbr.rel (%p550) target = $region83
        $region82: #{spike_posneg_forward.1} parent=78 // pred_region
          %s553 = smul.u32 2, %s24
          %p554 = scmp.lt.s32.totalorder %s25, 7
          %s555 = scalar_select %p554, %s25, 7
          %p556 = scmp.lt.s32.totalorder %s553, 3
          %s557 = scalar_select %p556, %s553, 3
          %s558 = smul.addr %s555, 4
          %s559 = sadd.s32 %s557, %s558
          %s560 = smul.addr %s559, 8
          %s561 = scalar_lea.vmem %s4, %s560
        $region83: #{spike_posneg_forward.1} parent=78 // pred_fallthru
          _
        // Predicated region
        $region84: #{spike_posneg_forward.1} parent=78 // pred_check
          %p562 = pneg %p178
        $region85: #{spike_posneg_forward.1} parent=78 // pred_check_branch
          %564 = sbr.rel (%p562) target = $region87
        $region86: #{spike_posneg_forward.1} parent=78 // pred_region
          %s565 = smul.u32 2, %s24
          %p566 = scmp.lt.s32.totalorder %s565, 3
          %s567 = scalar_select %p566, %s565, 3
          %s568 = smul.addr %s567, 8
          %s569 = scalar_lea.vmem %s5, %s568
        $region87: #{spike_posneg_forward.1} parent=78 // pred_fallthru
          _
        // Predicated region
        $region88: #{spike_posneg_forward.1} parent=78 // pred_check
          %p570 = pneg %p204
        $region89: #{spike_posneg_forward.1} parent=78 // pred_check_branch
          %572 = sbr.rel (%p570) target = $region91
        $region90: #{spike_posneg_forward.1} parent=78 // pred_region
          %s573 = smul.u32 2, %s24
          %p574 = scmp.lt.s32.totalorder %s573, 3
          %s575 = scalar_select %p574, %s573, 3
          %s576 = smul.addr %s575, 8
          %s577 = scalar_lea.vmem %s6, %s576
        $region91: #{spike_posneg_forward.1} parent=78 // pred_fallthru
          _
      $region79: #{spike_posneg_forward.1} parent=5 // pred_fallthru
        _
    $region6: #{spike_posneg_forward.1} parent=1 // loop_footer
      %s17 = sadd.s32 1, %s13
    $region7: #{spike_posneg_forward.1} parent=1 // loop_footer_branch
      %12 = sbr.rel target = $region3
    $region8: #{spike_posneg_forward.1} parent=1 // loop_exit
      _

</llo_original>
